<compile_context>
chip_gen: v6e
topology: v6e:2x2x1
jax: 0.10.0
libtpu: 0.0.40
codegen_flags: <defaults>
</compile_context>

<pallas_src>
import functools

import jax
import jax.numpy as jnp
from jax.experimental import pallas as pl
from jax.experimental.pallas import tpu as pltpu

LEAKY_SLOPE = 0.01
BN_EPS = 1e-5
_HALO = 128  # lane-aligned halo width; supports kernel_size up to 129


def _leaky_relu(v):
    # max(v, a*v) == LeakyReLU(v) for 0 < a < 1; cheaper than cmp+select.
    return jnp.maximum(v, LEAKY_SLOPE * v)


def _dsc_kernel(x_ref, xh_ref, dw_w_ref, dw_b_ref, pw_w_ref, pw_b_ref, o_ref,
                *, k_size, tile_l):
    # x_ref : (C_in, TILE_L)    main input window [j*TILE_L, (j+1)*TILE_L)
    # xh_ref: (C_in, 128)       halo window       [(j+1)*TILE_L, (j+1)*TILE_L+128)
    # dw_w  : (C_in, K)         depthwise weights with BN1 scale folded in
    # dw_b  : (C_in, 1)         depthwise bias with BN1 folded in
    # pw_w  : (C_out, C_in)     pointwise weights with BN2 scale folded in
    # pw_b  : (C_out, 1)        pointwise bias with BN2 folded in
    # o_ref : (C_out, TILE_L)
    xf = jnp.concatenate([x_ref[...], xh_ref[...]], axis=1).astype(jnp.float32)
    dw = dw_w_ref[...].astype(jnp.float32)
    width = tile_l + _HALO

    # Depthwise conv (stride 1, no padding): out[c, l] = sum_k w[c, k] * x[c, l + k].
    # Tap k: lane-rotate the full tile+halo by k (XLU slot, ~free), crop to the
    # 128-aligned first TILE_L lanes, multiply-accumulate on the VPU.
    acc = dw[:, 0:1] * xf[:, :tile_l] + dw_b_ref[...].astype(jnp.float32)
    for k in range(1, k_size):                    # K is small & static -> unrolled
        xk = pltpu.roll(xf, shift=width - k, axis=1)[:, :tile_l]
        acc = acc + dw[:, k:k + 1] * xk

    y = _leaky_relu(acc)                          # BN1 already folded into w/b

    # Pointwise (1x1) conv == channel matmul on the MXU.
    z = jnp.dot(pw_w_ref[...].astype(jnp.float32), y,
                preferred_element_type=jnp.float32)
    z = z + pw_b_ref[...].astype(jnp.float32)
    z = _leaky_relu(z)                            # BN2 already folded into w/b

    o_ref[...] = z.astype(o_ref.dtype)


def _round_up(v, m):
    return (v + m - 1) // m * m


def depth_separable_conv1d(x, params, *, tile_l=1024):
    """x: (N, C_in, L) float32. Returns (N, C_out, L - K + 1)."""
    N, C_in, L = x.shape
    dw_w = params["dw_w"]                          # (C_in, K)
    K = dw_w.shape[1]
    C_out = params["pw_w"].shape[0]
    L_out = L - K + 1
    assert L_out >= 1, "input length shorter than depthwise kernel"
    assert K - 1 <= _HALO, "kernel_size > 129 not supported by the 128-lane halo"

    # Fold inference-mode BatchNorm + conv biases into the weights.
    def fold_bn(gamma, beta, mean, var):
        scale = gamma / jnp.sqrt(var + BN_EPS)
        return scale, beta - mean * scale

    s1, b1 = fold_bn(params["bn1_gamma"], params["bn1_beta"],
                     params["bn1_mean"], params["bn1_var"])
    s2, b2 = fold_bn(params["bn2_gamma"], params["bn2_beta"],
                     params["bn2_mean"], params["bn2_var"])

    dw_w_f = (dw_w * s1[:, None]).astype(jnp.float32)              # (C_in, K)
    dw_b_f = (params["dw_b"] * s1 + b1).reshape(C_in, 1)           # (C_in, 1)
    pw_w_f = (params["pw_w"] * s2[:, None]).astype(jnp.float32)    # (C_out, C_in)
    pw_b_f = (params["pw_b"] * s2 + b2).reshape(C_out, 1)          # (C_out, 1)

    # Length tiling: output tiles of tile_l (multiple of 128). The input block
    # for tile j is the matching tile_l window plus a 128-wide halo block read
    # from the same (zero-padded) HBM buffer at block index (j+1)*tile_l/128.
    tile_l = max(128, min(_round_up(L_out, 128), tile_l))
    assert tile_l % 128 == 0
    n_tiles = pl.cdiv(L_out, tile_l)
    L_pad = n_tiles * tile_l + _HALO
    x_pad = x if L_pad == L else jnp.pad(x, ((0, 0), (0, 0), (0, L_pad - L)))
    halo_blk = tile_l // 128                       # halo start in 128-wide blocks

    kernel = functools.partial(_dsc_kernel, k_size=K, tile_l=tile_l)

    flops = 2 * N * L_out * (K * C_in + C_in * C_out)
    bytes_accessed = 4 * (N * C_in * L_pad + N * C_out * n_tiles * tile_l
                          + C_in * (K + 1) + C_out * (C_in + 1))

    out = pl.pallas_call(
        kernel,
        out_shape=jax.ShapeDtypeStruct((N, C_out, n_tiles * tile_l), x.dtype),
        grid=(N, n_tiles),
        in_specs=[
            # main input window (batch dim squeezed)
            pl.BlockSpec((None, C_in, tile_l), lambda n, j: (n, 0, j)),
            # 128-wide halo window starting at (j+1)*tile_l (same HBM buffer)
            pl.BlockSpec((None, C_in, 128),
                         lambda n, j: (n, 0, (j + 1) * halo_blk)),
            pl.BlockSpec((C_in, K), lambda n, j: (0, 0)),      # dw_w (BN folded)
            pl.BlockSpec((C_in, 1), lambda n, j: (0, 0)),      # dw_b (BN folded)
            pl.BlockSpec((C_out, C_in), lambda n, j: (0, 0)),  # pw_w (BN folded)
            pl.BlockSpec((C_out, 1), lambda n, j: (0, 0)),     # pw_b (BN folded)
        ],
        out_specs=pl.BlockSpec((None, C_out, tile_l), lambda n, j: (n, 0, j)),
        compiler_params=pltpu.CompilerParams(
            dimension_semantics=("parallel", "parallel")),
        cost_estimate=pl.CostEstimate(flops=flops, transcendentals=0,
                                      bytes_accessed=bytes_accessed),
    )(x_pad, x_pad, dw_w_f, dw_b_f, pw_w_f, pw_b_f)

    return out[:, :, :L_out]


def ref_forward(x, params):
    """Pure-JAX (f32, VPU-exact) reference of the same forward pass (BN in eval mode)."""
    dw_w, dw_b = params["dw_w"], params["dw_b"]
    K = dw_w.shape[1]
    L_out = x.shape[-1] - K + 1
    y = jnp.zeros((x.shape[0], x.shape[1], L_out), jnp.float32)
    for k in range(K):
        y = y + dw_w[None, :, k:k + 1] * x[:, :, k:k + L_out]
    y = y + dw_b[None, :, None]

    def bn(v, g, b, m, var):
        return (v - m[None, :, None]) / jnp.sqrt(var[None, :, None] + BN_EPS) \
               * g[None, :, None] + b[None, :, None]

    y = bn(y, params["bn1_gamma"], params["bn1_beta"],
           params["bn1_mean"], params["bn1_var"])
    y = jnp.where(y > 0, y, LEAKY_SLOPE * y)

    # pointwise conv done as an explicit f32 broadcast-sum (no MXU) for an exact ref
    z = (params["pw_w"][None, :, :, None] * y[:, None, :, :]).sum(axis=2)
    z = z + params["pw_b"][None, :, None]
    z = bn(z, params["bn2_gamma"], params["bn2_beta"],
           params["bn2_mean"], params["bn2_var"])
    z = jnp.where(z > 0, z, LEAKY_SLOPE * z)
    return z


def make_params(key, c_in, c_out, k):
    ks = jax.random.split(key, 6)
    return {
        "dw_w": 0.1 * jax.random.normal(ks[0], (c_in, k), jnp.float32),
        "dw_b": 0.1 * jax.random.normal(ks[1], (c_in,), jnp.float32),
        "bn1_gamma": 1.0 + 0.1 * jax.random.normal(ks[2], (c_in,), jnp.float32),
        "bn1_beta": 0.1 * jax.random.normal(ks[3], (c_in,), jnp.float32),
        "bn1_mean": jnp.zeros((c_in,), jnp.float32),
        "bn1_var": jnp.ones((c_in,), jnp.float32),
        "pw_w": 0.1 * jax.random.normal(ks[4], (c_out, c_in), jnp.float32),
        "pw_b": 0.1 * jax.random.normal(ks[5], (c_out,), jnp.float32),
        "bn2_gamma": jnp.ones((c_out,), jnp.float32),
        "bn2_beta": jnp.zeros((c_out,), jnp.float32),
        "bn2_mean": jnp.zeros((c_out,), jnp.float32),
        "bn2_var": jnp.ones((c_out,), jnp.float32),
    }


if __name__ == "__main__":
    key = jax.random.PRNGKey(0)

    # Case 1: tiny module-like shapes (single L tile, default tile_l).
    # Case 2: longer non-128-multiple length with tile_l=256 -> 4 L tiles,
    #         exercises the halo-crossing path and lane-dense cropping.
    cases = [(2, 4, 8, 16, 3, None), (2, 8, 16, 1000, 5, 256)]
    for (N, C_IN, C_OUT, L, K, TL) in cases:
        key, kx, kp = jax.random.split(key, 3)
        x = jax.random.normal(kx, (N, C_IN, L), jnp.float32)
        params = make_params(kp, C_IN, C_OUT, K)

        if TL is None:
            out = depth_separable_conv1d(x, params)
        else:
            out = depth_separable_conv1d(x, params, tile_l=TL)
        out = jax.block_until_ready(out)
        ref = ref_forward(x, params)

        assert out.shape == (N, C_OUT, L - K + 1), out.shape
        err = float(jnp.max(jnp.abs(out - ref)))
        assert err < 2e-3, err

    print("KERNEL_OK")
</pallas_src>

<mosaic_0001>
module attributes {stable_mosaic.version = 11 : i64} {
  func.func @_dsc_kernel(%arg0: i32, %arg1: i32, %arg2: memref<1x4x128xf32, #tpu.memory_space<vmem>>, %arg3: memref<1x4x128xf32, #tpu.memory_space<vmem>>, %arg4: memref<4x3xf32, #tpu.memory_space<vmem>>, %arg5: memref<4x1xf32, #tpu.memory_space<vmem>>, %arg6: memref<8x4xf32, #tpu.memory_space<vmem>>, %arg7: memref<8x1xf32, #tpu.memory_space<vmem>>, %arg8: memref<1x8x128xf32, #tpu.memory_space<vmem>>) attributes {dimension_semantics = [#tpu.dimension_semantics<parallel>, #tpu.dimension_semantics<parallel>], iteration_bounds = array<i64: 2, 1>, scalar_prefetch = 0 : i64, scratch_operands = 0 : i64, tpu.core_type = #tpu.core_type<tc>, window_params = [{transform_indices = @transform_0, window_bounds = array<i64: 1, 4, 128>}, {transform_indices = @transform_1, window_bounds = array<i64: 1, 4, 128>}, {pipeline_mode = #tpu.pipeline_mode<synchronous>, transform_indices = @transform_2, window_bounds = array<i64: 4, 3>}, {pipeline_mode = #tpu.pipeline_mode<synchronous>, transform_indices = @transform_3, window_bounds = array<i64: 4, 1>}, {pipeline_mode = #tpu.pipeline_mode<synchronous>, transform_indices = @transform_4, window_bounds = array<i64: 8, 4>}, {pipeline_mode = #tpu.pipeline_mode<synchronous>, transform_indices = @transform_5, window_bounds = array<i64: 8, 1>}, {transform_indices = @transform_6, window_bounds = array<i64: 1, 8, 128>}]} {
    %c0 = arith.constant 0 : index
    %c0_0 = arith.constant 0 : index
    %c0_1 = arith.constant 0 : index
    %0 = vector.load %arg2[%c0, %c0_0, %c0_1] : memref<1x4x128xf32, #tpu.memory_space<vmem>>, vector<1x4x128xf32>
    %1 = vector.shape_cast %0 : vector<1x4x128xf32> to vector<4x128xf32>
    %c0_2 = arith.constant 0 : index
    %c0_3 = arith.constant 0 : index
    %c0_4 = arith.constant 0 : index
    %2 = vector.load %arg3[%c0_2, %c0_3, %c0_4] : memref<1x4x128xf32, #tpu.memory_space<vmem>>, vector<1x4x128xf32>
    %3 = vector.shape_cast %2 : vector<1x4x128xf32> to vector<4x128xf32>
    %4 = tpu.concatenate %1, %3 in 1 : vector<4x128xf32>, vector<4x128xf32> -> vector<4x256xf32>
    %c0_5 = arith.constant 0 : index
    %c0_6 = arith.constant 0 : index
    %5 = vector.load %arg4[%c0_5, %c0_6] : memref<4x3xf32, #tpu.memory_space<vmem>>, vector<4x3xf32>
    %6 = vector.extract_strided_slice %5 {offsets = [0, 0], sizes = [4, 1], strides = [1, 1]} : vector<4x3xf32> to vector<4x1xf32>
    %7 = vector.extract_strided_slice %4 {offsets = [0, 0], sizes = [4, 128], strides = [1, 1]} : vector<4x256xf32> to vector<4x128xf32>
    %8 = vector.broadcast %6 : vector<4x1xf32> to vector<4x128xf32>
    %9 = arith.mulf %8, %7 : vector<4x128xf32>
    %c0_7 = arith.constant 0 : index
    %c0_8 = arith.constant 0 : index
    %10 = vector.load %arg5[%c0_7, %c0_8] : memref<4x1xf32, #tpu.memory_space<vmem>>, vector<4x1xf32>
    %11 = vector.broadcast %10 : vector<4x1xf32> to vector<4x128xf32>
    %12 = arith.addf %9, %11 : vector<4x128xf32>
    %c255_i32 = arith.constant 255 : i32
    %13 = tpu.dynamic_rotate %4 by %c255_i32 dim 1 : vector<4x256xf32>, i32 -> vector<4x256xf32>
    %14 = vector.extract_strided_slice %13 {offsets = [0, 0], sizes = [4, 128], strides = [1, 1]} : vector<4x256xf32> to vector<4x128xf32>
    %15 = vector.extract_strided_slice %5 {offsets = [0, 1], sizes = [4, 1], strides = [1, 1]} : vector<4x3xf32> to vector<4x1xf32>
    %16 = vector.broadcast %15 : vector<4x1xf32> to vector<4x128xf32>
    %17 = arith.mulf %16, %14 : vector<4x128xf32>
    %18 = arith.addf %12, %17 : vector<4x128xf32>
    %c254_i32 = arith.constant 254 : i32
    %19 = tpu.dynamic_rotate %4 by %c254_i32 dim 1 : vector<4x256xf32>, i32 -> vector<4x256xf32>
    %20 = vector.extract_strided_slice %19 {offsets = [0, 0], sizes = [4, 128], strides = [1, 1]} : vector<4x256xf32> to vector<4x128xf32>
    %21 = vector.extract_strided_slice %5 {offsets = [0, 2], sizes = [4, 1], strides = [1, 1]} : vector<4x3xf32> to vector<4x1xf32>
    %22 = vector.broadcast %21 : vector<4x1xf32> to vector<4x128xf32>
    %23 = arith.mulf %22, %20 : vector<4x128xf32>
    %24 = arith.addf %18, %23 : vector<4x128xf32>
    %cst = arith.constant 0.00999999977 : f32
    %25 = vector.broadcast %cst : f32 to vector<4x128xf32>
    %26 = arith.mulf %25, %24 : vector<4x128xf32>
    %27 = arith.maximumf %24, %26 : vector<4x128xf32>
    %c0_9 = arith.constant 0 : index
    %c0_10 = arith.constant 0 : index
    %28 = vector.load %arg6[%c0_9, %c0_10] : memref<8x4xf32, #tpu.memory_space<vmem>>, vector<8x4xf32>
    %cst_11 = arith.constant dense<0.000000e+00> : vector<8x128xf32>
    %29 = tpu.matmul %28, %27, %cst_11 {dimension_numbers = #tpu.dot_dimension_numbers<[1], [0], [0], [1], [0, 0, 1, 1], [], []>} : vector<8x4xf32>, vector<4x128xf32>, vector<8x128xf32> -> vector<8x128xf32>
    %c0_12 = arith.constant 0 : index
    %c0_13 = arith.constant 0 : index
    %30 = vector.load %arg7[%c0_12, %c0_13] : memref<8x1xf32, #tpu.memory_space<vmem>>, vector<8x1xf32>
    %31 = vector.broadcast %30 : vector<8x1xf32> to vector<8x128xf32>
    %32 = arith.addf %29, %31 : vector<8x128xf32>
    %cst_14 = arith.constant 0.00999999977 : f32
    %33 = vector.broadcast %cst_14 : f32 to vector<8x128xf32>
    %34 = arith.mulf %33, %32 : vector<8x128xf32>
    %35 = arith.maximumf %32, %34 : vector<8x128xf32>
    %c0_15 = arith.constant 0 : index
    %c0_16 = arith.constant 0 : index
    %c0_17 = arith.constant 0 : index
    %36 = vector.load %arg8[%c0_15, %c0_16, %c0_17] : memref<1x8x128xf32, #tpu.memory_space<vmem>>, vector<1x8x128xf32>
    %37 = vector.shape_cast %36 : vector<1x8x128xf32> to vector<8x128xf32>
    %38 = vector.shape_cast %35 : vector<8x128xf32> to vector<1x8x128xf32>
    tpu.vector_store %arg8[%c0_15, %c0_16, %c0_17], %38 {strides = array<i32>} : memref<1x8x128xf32, #tpu.memory_space<vmem>>, vector<1x8x128xf32>,
    return
  }
  func.func @transform_0(%arg0: i32, %arg1: i32) -> (i32, i32, i32) {
    %c0_i32 = arith.constant 0 : i32
    %c0_i32_0 = arith.constant 0 : i32
    return %arg0, %c0_i32, %arg1 : i32, i32, i32
  }
  func.func @transform_1(%arg0: i32, %arg1: i32) -> (i32, i32, i32) {
    %c1_i32 = arith.constant 1 : i32
    %0 = arith.addi %arg1, %c1_i32 : i32
    %c1_i32_0 = arith.constant 1 : i32
    %1 = arith.muli %0, %c1_i32_0 : i32
    %c0_i32 = arith.constant 0 : i32
    %c0_i32_1 = arith.constant 0 : i32
    return %arg0, %c0_i32, %1 : i32, i32, i32
  }
  func.func @transform_2(%arg0: i32, %arg1: i32) -> (i32, i32) {
    %c0_i32 = arith.constant 0 : i32
    %c0_i32_0 = arith.constant 0 : i32
    %c0_i32_1 = arith.constant 0 : i32
    return %c0_i32, %c0_i32_0 : i32, i32
  }
  func.func @transform_3(%arg0: i32, %arg1: i32) -> (i32, i32) {
    %c0_i32 = arith.constant 0 : i32
    %c0_i32_0 = arith.constant 0 : i32
    %c0_i32_1 = arith.constant 0 : i32
    return %c0_i32, %c0_i32_0 : i32, i32
  }
  func.func @transform_4(%arg0: i32, %arg1: i32) -> (i32, i32) {
    %c0_i32 = arith.constant 0 : i32
    %c0_i32_0 = arith.constant 0 : i32
    %c0_i32_1 = arith.constant 0 : i32
    return %c0_i32, %c0_i32_0 : i32, i32
  }
  func.func @transform_5(%arg0: i32, %arg1: i32) -> (i32, i32) {
    %c0_i32 = arith.constant 0 : i32
    %c0_i32_0 = arith.constant 0 : i32
    %c0_i32_1 = arith.constant 0 : i32
    return %c0_i32, %c0_i32_0 : i32, i32
  }
  func.func @transform_6(%arg0: i32, %arg1: i32) -> (i32, i32, i32) {
    %c0_i32 = arith.constant 0 : i32
    %c0_i32_0 = arith.constant 0 : i32
    return %arg0, %c0_i32, %arg1 : i32, i32, i32
  }
}

</mosaic_0001>

<llo_original>
// kernel: tpu_custom_call.1
$region0: #{tpu_custom_call.1}
  #allocation0 [shape = 'u32[]', space=smem, size = 0x4, offset = 0x4, fixed_abs, tag = 'smem constant byte address 0x4 - core index']
  #allocation1 [shape = 'u32[144,128]{1,0:T(1,128)}', space=vmem, size = 0x12000, scoped, tag = 'internal scratch']
  %s0 = inlined_call_operand.vmem [shape: f32[2,4,256], index: 0, kind: input, shape index: {}]
  %s1 = inlined_call_operand.hbm [shape: f32[2,4,256], index: 1, kind: input, shape index: {}]
  %s2 = inlined_call_operand.vmem [shape: f32[4,3], index: 2, kind: input, shape index: {}]
  %s3 = inlined_call_operand.vmem [shape: f32[4,1], index: 3, kind: input, shape index: {}]
  %s4 = inlined_call_operand.vmem [shape: f32[8,4], index: 4, kind: input, shape index: {}]
  %s5 = inlined_call_operand.vmem [shape: f32[8,1], index: 5, kind: input, shape index: {}]
  %s6 = inlined_call_operand.hbm [shape: f32[2,8,128], index: 6, kind: output, shape index: {}]
  %s7 = sld [smem:[#allocation0]]
  $region61: #{tpu_custom_call.1} parent=0
    _
  %s9 = ssub.s32 1, %s7
  %s10 = scalar_select 0, %s9, %s7
  $region1: #{tpu_custom_call.1} parent=0
    #allocation2 [shape = 'u8[4096]{0}', space=vmem, size = 0x1000, scoped, tag = 'input window, operand 1']
    #allocation3 [shape = 's32[2]{0}', space=sflag, size = 0x8, scoped, tag = 'scoped memory for tpu_custom_call.1']
    #allocation4 [shape = 's32[2]{0}', space=sflag, size = 0x8, scoped, tag = 'scoped memory for tpu_custom_call.1']
    #allocation5 [shape = 'u8[8192]{0}', space=vmem, size = 0x2000, scoped, tag = 'output window, operand 0']
    %11 = vsyncpa [#allocation3], 0
    %s12 = scalar_lea.sflag [#allocation3], 1
    %13 = vsyncpa %s12, 0
    %14 = vsyncpa [#allocation4], 0
    %s15 = scalar_lea.sflag [#allocation4], 1
    %16 = vsyncpa %s15, 0
    loop: start=0, step=1, limit=4
    $region2: #{tpu_custom_call.1} parent=1 // loop_pre_header
      _
    $region3: #{tpu_custom_call.1} parent=1 // loop_header
      %s18 = sphi 0, %s22
      %p19 = scmp.ge.s32.totalorder %s18, 4
      %s25 = sphi 0, %s37
      %s26 = sphi 0, %s33
      %s27 = sphi 0, %s25
      %s28 = sphi 0, %s26
      %s29 = sphi 0, %s27
      %s30 = sphi 0, %s28
      %s42 = sphi 0, %s44
      %s45 = sphi 0, %s42
      %s46 = sphi 0, %s45
      %s62 = sphi 0, %s46
      %s72 = sphi 0, %s74
      %s75 = sphi 0, %s72
      %s76 = sphi 0, %s75
      %s92 = sphi 0, %s76
      %s96 = sphi 0, %s96
      %s98 = sphi 0, %s96
      %s99 = sphi 0, %s98
      %s113 = sphi 0, %s99
      %s117 = sphi 0, %s117
      %s119 = sphi 0, %s117
      %s120 = sphi 0, %s119
      %s134 = sphi 0, %s120
      %s138 = sphi 0, %s138
      %s140 = sphi 0, %s138
      %s141 = sphi 0, %s140
      %s155 = sphi 0, %s141
      %s159 = sphi 0, %s159
      %s161 = sphi 0, %s159
      %s162 = sphi 0, %s161
      %s176 = sphi 0, %s162
      %s184 = sphi 0, %s186
      %s187 = sphi 0, %s184
      %s188 = sphi 0, %s187
      %s204 = sphi 0, %s188
    $region4: #{tpu_custom_call.1} parent=1 // loop_header_branch
      %21 = sbr.rel (%p19) target = $region8
    $region5: #{tpu_custom_call.1} parent=1 // loop_body
      %s23 = ssub.s32 %s18, 1
      %s24 = ssub.s32 %s18, 2
      %s31 = sadd.s32 1, %s26
      %p32 = scmp.ge.s32.totalorder %s31, 1
      %s33 = scalar_select %p32, 0, %s31
      %s34 = sadd.s32 1, %s25
      %s35 = scalar_select %p32, %s34, %s25
      %p36 = scmp.ge.s32.totalorder %s35, 2
      %s37 = scalar_select %p36, 0, %s35
      %s38 = ssub.s32 %s25, %s37
      %s39 = ssub.s32 %s26, %s33
      %s40 = sor.u32 %s38, %s39
      %p41 = scmp.eq.s32.totalorder %s40, 0
      %s43 = sadd.s32 %s42, 1
      %s44 = scalar_select %p41, %s42, %s43
      %p47 = pneg %p41
      %p48 = scmp.eq.s32.totalorder %s18, 1
      %p49 = por %p47, %p48
      %p50 = scmp.ne.s32.totalorder %s42, %s45
      %p51 = scmp.eq.s32.totalorder %s18, 0
      %p52 = por %p50, %p51
      %p53 = scmp.ne.s32.totalorder %s42, %s45
      %p54 = scmp.eq.s32.totalorder %s23, 1
      %p55 = por %p53, %p54
      %p56 = scmp.ne.s32.totalorder %s45, %s46
      %p57 = scmp.eq.s32.totalorder %s23, 0
      %p58 = por %p56, %p57
      %p59 = scmp.ne.s32.totalorder %s45, %s46
      %p60 = scmp.eq.s32.totalorder %s24, 1
      %p61 = por %p59, %p60
      %p63 = scmp.ne.s32.totalorder %s46, %s62
      %p64 = scmp.eq.s32.totalorder %s24, 0
      %p65 = por %p63, %p64
      %s66 = sadd.s32 %s26, 1
      %s67 = sadd.s32 %s33, 1
      %s68 = ssub.s32 %s25, %s37
      %s69 = ssub.s32 %s66, %s67
      %s70 = sor.u32 %s68, %s69
      %p71 = scmp.eq.s32.totalorder %s70, 0
      %s73 = sadd.s32 %s72, 1
      %s74 = scalar_select %p71, %s72, %s73
      %p77 = pneg %p71
      %p78 = scmp.eq.s32.totalorder %s18, 1
      %p79 = por %p77, %p78
      %p80 = scmp.ne.s32.totalorder %s72, %s75
      %p81 = scmp.eq.s32.totalorder %s18, 0
      %p82 = por %p80, %p81
      %p83 = scmp.ne.s32.totalorder %s72, %s75
      %p84 = scmp.eq.s32.totalorder %s23, 1
      %p85 = por %p83, %p84
      %p86 = scmp.ne.s32.totalorder %s75, %s76
      %p87 = scmp.eq.s32.totalorder %s23, 0
      %p88 = por %p86, %p87
      %p89 = scmp.ne.s32.totalorder %s75, %s76
      %p90 = scmp.eq.s32.totalorder %s24, 1
      %p91 = por %p89, %p90
      %p93 = scmp.ne.s32.totalorder %s76, %s92
      %p94 = scmp.eq.s32.totalorder %s24, 0
      %p95 = por %p93, %p94
      %s97 = sadd.s32 %s96, 1
      %p100 = scmp.eq.s32.totalorder %s18, 1
      %p101 = scmp.ne.s32.totalorder %s96, %s98
      %p102 = scmp.eq.s32.totalorder %s18, 0
      %p103 = por %p101, %p102
      %p104 = scmp.ne.s32.totalorder %s96, %s98
      %p105 = scmp.eq.s32.totalorder %s23, 1
      %p106 = por %p104, %p105
      %p107 = scmp.ne.s32.totalorder %s98, %s99
      %p108 = scmp.eq.s32.totalorder %s23, 0
      %p109 = por %p107, %p108
      %p110 = scmp.ne.s32.totalorder %s98, %s99
      %p111 = scmp.eq.s32.totalorder %s24, 1
      %p112 = por %p110, %p111
      %p114 = scmp.ne.s32.totalorder %s99, %s113
      %p115 = scmp.eq.s32.totalorder %s24, 0
      %p116 = por %p114, %p115
      %s118 = sadd.s32 %s117, 1
      %p121 = scmp.eq.s32.totalorder %s18, 1
      %p122 = scmp.ne.s32.totalorder %s117, %s119
      %p123 = scmp.eq.s32.totalorder %s18, 0
      %p124 = por %p122, %p123
      %p125 = scmp.ne.s32.totalorder %s117, %s119
      %p126 = scmp.eq.s32.totalorder %s23, 1
      %p127 = por %p125, %p126
      %p128 = scmp.ne.s32.totalorder %s119, %s120
      %p129 = scmp.eq.s32.totalorder %s23, 0
      %p130 = por %p128, %p129
      %p131 = scmp.ne.s32.totalorder %s119, %s120
      %p132 = scmp.eq.s32.totalorder %s24, 1
      %p133 = por %p131, %p132
      %p135 = scmp.ne.s32.totalorder %s120, %s134
      %p136 = scmp.eq.s32.totalorder %s24, 0
      %p137 = por %p135, %p136
      %s139 = sadd.s32 %s138, 1
      %p142 = scmp.eq.s32.totalorder %s18, 1
      %p143 = scmp.ne.s32.totalorder %s138, %s140
      %p144 = scmp.eq.s32.totalorder %s18, 0
      %p145 = por %p143, %p144
      %p146 = scmp.ne.s32.totalorder %s138, %s140
      %p147 = scmp.eq.s32.totalorder %s23, 1
      %p148 = por %p146, %p147
      %p149 = scmp.ne.s32.totalorder %s140, %s141
      %p150 = scmp.eq.s32.totalorder %s23, 0
      %p151 = por %p149, %p150
      %p152 = scmp.ne.s32.totalorder %s140, %s141
      %p153 = scmp.eq.s32.totalorder %s24, 1
      %p154 = por %p152, %p153
      %p156 = scmp.ne.s32.totalorder %s141, %s155
      %p157 = scmp.eq.s32.totalorder %s24, 0
      %p158 = por %p156, %p157
      %s160 = sadd.s32 %s159, 1
      %p163 = scmp.eq.s32.totalorder %s18, 1
      %p164 = scmp.ne.s32.totalorder %s159, %s161
      %p165 = scmp.eq.s32.totalorder %s18, 0
      %p166 = por %p164, %p165
      %p167 = scmp.ne.s32.totalorder %s159, %s161
      %p168 = scmp.eq.s32.totalorder %s23, 1
      %p169 = por %p167, %p168
      %p170 = scmp.ne.s32.totalorder %s161, %s162
      %p171 = scmp.eq.s32.totalorder %s23, 0
      %p172 = por %p170, %p171
      %p173 = scmp.ne.s32.totalorder %s161, %s162
      %p174 = scmp.eq.s32.totalorder %s24, 1
      %p175 = por %p173, %p174
      %p177 = scmp.ne.s32.totalorder %s162, %s176
      %p178 = scmp.eq.s32.totalorder %s24, 0
      %p179 = por %p177, %p178
      %s180 = ssub.s32 %s25, %s37
      %s181 = ssub.s32 %s26, %s33
      %s182 = sor.u32 %s180, %s181
      %p183 = scmp.eq.s32.totalorder %s182, 0
      %s185 = sadd.s32 %s184, 1
      %s186 = scalar_select %p183, %s184, %s185
      %p189 = pneg %p183
      %p190 = scmp.eq.s32.totalorder %s18, 1
      %p191 = por %p189, %p190
      %p192 = scmp.ne.s32.totalorder %s184, %s187
      %p193 = scmp.eq.s32.totalorder %s18, 0
      %p194 = por %p192, %p193
      %p195 = scmp.ne.s32.totalorder %s184, %s187
      %p196 = scmp.eq.s32.totalorder %s23, 1
      %p197 = por %p195, %p196
      %p198 = scmp.ne.s32.totalorder %s187, %s188
      %p199 = scmp.eq.s32.totalorder %s23, 0
      %p200 = por %p198, %p199
      %p201 = scmp.ne.s32.totalorder %s187, %s188
      %p202 = scmp.eq.s32.totalorder %s24, 1
      %p203 = por %p201, %p202
      %p205 = scmp.ne.s32.totalorder %s188, %s204
      %p206 = scmp.eq.s32.totalorder %s24, 0
      %p207 = por %p205, %p206
      %p208 = scmp.le.s32.totalorder 1, %s18
      %p209 = scmp.lt.s32.totalorder %s18, 3
      %p210 = pnand %p208, %p209
      %p211 = pneg %p210
      // Predicated region
      $region9: #{tpu_custom_call.1} parent=5 // pred_check
        _
      $region10: #{tpu_custom_call.1} parent=5 // pred_check_branch
        %213 = sbr.rel (%p210) target = $region12
      $region11: #{tpu_custom_call.1} parent=5 // pred_region
        %s214 = ssub.s32 %s18, 1
        // Predicated region
        $region13: #{tpu_custom_call.1} parent=11 // pred_check
          %p215 = pneg %p109
        $region14: #{tpu_custom_call.1} parent=11 // pred_check_branch
          %217 = sbr.rel (%p215) target = $region16
        $region15: #{tpu_custom_call.1} parent=11 // pred_region
          _
        $region16: #{tpu_custom_call.1} parent=11 // pred_fallthru
          _
        // Predicated region
        $region17: #{tpu_custom_call.1} parent=11 // pred_check
          %p218 = pneg %p130
        $region18: #{tpu_custom_call.1} parent=11 // pred_check_branch
          %220 = sbr.rel (%p218) target = $region20
        $region19: #{tpu_custom_call.1} parent=11 // pred_region
          _
        $region20: #{tpu_custom_call.1} parent=11 // pred_fallthru
          _
        // Predicated region
        $region21: #{tpu_custom_call.1} parent=11 // pred_check
          %p221 = pneg %p151
        $region22: #{tpu_custom_call.1} parent=11 // pred_check_branch
          %223 = sbr.rel (%p221) target = $region24
        $region23: #{tpu_custom_call.1} parent=11 // pred_region
          _
        $region24: #{tpu_custom_call.1} parent=11 // pred_fallthru
          _
        // Predicated region
        $region25: #{tpu_custom_call.1} parent=11 // pred_check
          %p224 = pneg %p172
        $region26: #{tpu_custom_call.1} parent=11 // pred_check_branch
          %226 = sbr.rel (%p224) target = $region28
        $region27: #{tpu_custom_call.1} parent=11 // pred_region
          _
        $region28: #{tpu_custom_call.1} parent=11 // pred_fallthru
          _
      $region12: #{tpu_custom_call.1} parent=5 // pred_fallthru
        _
      %p227 = scmp.lt.s32.totalorder %s18, 2
      // Predicated region
      $region29: #{tpu_custom_call.1} parent=5 // pred_check
        %p228 = pneg %p227
      $region30: #{tpu_custom_call.1} parent=5 // pred_check_branch
        %230 = sbr.rel (%p228) target = $region32
      $region31: #{tpu_custom_call.1} parent=5 // pred_region
        // Predicated region
        $region33: #{tpu_custom_call.1} parent=31 // pred_check
          %p231 = pneg %p52
        $region34: #{tpu_custom_call.1} parent=31 // pred_check_branch
          %233 = sbr.rel (%p231) target = $region36
        $region35: #{tpu_custom_call.1} parent=31 // pred_region
          %p234 = scmp.lt.s32.totalorder %s25, 1
          %s235 = scalar_select %p234, %s25, 1
          %p236 = scmp.lt.s32.totalorder %s26, 1
          %s237 = scalar_select %p236, %s26, 1
          %s238 = smul.addr %s235, 2
          %s239 = sadd.s32 %s237, %s238
          %s240 = smul.addr %s239, 4
          %s241 = scalar_lea.vmem %s0, %s240
        $region36: #{tpu_custom_call.1} parent=31 // pred_fallthru
          _
        // Predicated region
        $region37: #{tpu_custom_call.1} parent=31 // pred_check
          %p242 = pneg %p82
        $region38: #{tpu_custom_call.1} parent=31 // pred_check_branch
          %244 = sbr.rel (%p242) target = $region40
        $region39: #{tpu_custom_call.1} parent=31 // pred_region
          %s245 = sand.u32 %s72, 1
          %s246 = scalar_lea.sflag [#allocation3], %s245
          %s247 = sand.u32 %s72, 1
          %s248 = smul.addr %s247, 4
          %s249 = scalar_lea.vmem [#allocation2], %s248
          %s250 = sadd.s32 %s26, 1
          %s252 = ssub.s32 64, 64
          %253 = vsyncadd %s246, %s252
          %s254 = smul.addr %s25, 2
          %s255 = sadd.s32 %s250, %s254
          %s256 = smul.addr %s255, 64
          %s257 = scalar_lea.hbm %s1, %s256
          %s259 = sshll.u32 %s249, 4
          %s260 = int_to_ptr.vmem [resolvable:$true] %s259
          %262 = dma.hbm_to_vmem [thread:$0]  %s257, 64, %s260, %s246
        $region40: #{tpu_custom_call.1} parent=31 // pred_fallthru
          _
      $region32: #{tpu_custom_call.1} parent=5 // pred_fallthru
        _
      %p263 = scmp.le.s32.totalorder 1, %s18
      %p264 = scmp.lt.s32.totalorder %s18, 3
      %p265 = pnand %p263, %p264
      %p266 = pneg %p265
      // Predicated region
      $region41: #{tpu_custom_call.1} parent=5 // pred_check
        _
      $region42: #{tpu_custom_call.1} parent=5 // pred_check_branch
        %268 = sbr.rel (%p265) target = $region44
      $region43: #{tpu_custom_call.1} parent=5 // pred_region
        %s269 = ssub.s32 %s18, 1
        %s270 = sand.u32 %s75, 1
        %s271 = scalar_lea.sflag [#allocation3], %s270
        %s272 = sand.u32 %s75, 1
        %s273 = smul.addr %s272, 4
        %s274 = scalar_lea.vmem [#allocation2], %s273
        // Predicated region
        $region45: #{tpu_custom_call.1} parent=43 // pred_check
          %p275 = pneg %p88
        $region46: #{tpu_custom_call.1} parent=43 // pred_check_branch
          %277 = sbr.rel (%p275) target = $region48
        $region47: #{tpu_custom_call.1} parent=43 // pred_region
          %278 = dma.done %s271, 64
        $region48: #{tpu_custom_call.1} parent=43 // pred_fallthru
          _
        %p279 = scmp.lt.s32.totalorder %s27, 1
        %s280 = scalar_select %p279, %s27, 1
        %p281 = scmp.lt.s32.totalorder %s28, 1
        %s282 = scalar_select %p281, %s28, 1
        %s283 = smul.addr %s280, 2
        %s284 = sadd.s32 %s282, %s283
        %s285 = smul.addr %s284, 4
        %s286 = scalar_lea.vmem %s0, %s285
        %p287 = pneg %p58
        %p288 = pneg %p55
        %s289 = sand.u32 %s75, 1
        %s290 = scalar_lea.sflag [#allocation3], %s289
        %s291 = sand.u32 %s75, 1
        %s292 = smul.addr %s291, 4
        %s293 = scalar_lea.vmem [#allocation2], %s292
        %p294 = pneg %p88
        %p295 = pneg %p85
        %p296 = pneg %p109
        %p297 = pneg %p106
        %p298 = pneg %p130
        %p299 = pneg %p127
        %p300 = pneg %p151
        %p301 = pneg %p148
        %p302 = pneg %p172
        %p303 = pneg %p169
        %p304 = pneg %p200
        %p305 = pneg %p197
        %s306 = sand.u32 %s187, 1
        %s307 = scalar_lea.sflag [#allocation4], %s306
        %s308 = sand.u32 %s187, 1
        %s309 = smul.addr %s308, 8
        %s310 = scalar_lea.vmem [#allocation5], %s309
        %p311 = scmp.lt.s32.totalorder %s27, 1
        %s312 = scalar_select %p311, %s27, 1
        %p313 = scmp.lt.s32.totalorder %s28, 1
        %s314 = scalar_select %p313, %s28, 1
        %s315 = smul.addr %s312, 2
        %s316 = sadd.s32 %s314, %s315
        %s317 = smul.addr %s316, 4
        %s318 = scalar_lea.vmem %s0, %s317
        %s319 = sadd.s32 %s28, 1
        %v320 = vld [vmem:[%s318] sm:$0xf]
        %v321 = vld [vmem:[%s274] sm:$0xf]
        %v322 = vld [vmem:[%s2] sm:$0xf]
        %324 = vset.pattern.permute.xlu0 0
        %325 = vperm.xlu0 %324, %v322
        %v326 = vpop.permute.xlu0 %325
        %v328 = vmul.f32 %v326, %v320
        %v329 = vld [vmem:[%s3] sm:$0xf]
        %331 = vset.pattern.permute.xlu0 0
        %332 = vperm.xlu0 %331, %v329
        %v333 = vpop.permute.xlu0 %332
        %v335 = vadd.f32 %v328, %v333
        %336 = vrot.lane.b32.xlu0 %v320, 127
        %v337 = vpop.permute.xlu0 %336
        %338 = vrot.lane.b32.xlu0 %v321, 127
        %v339 = vpop.permute.xlu0 %338
        %v340 = vlaneseq
        %v341 = vand.u32 %v340, 127
        %vm342 = vcmp.lt.s32.totalorder %v341, 127
        %v343 = vsel %vm342, %v337, %v339
        %344 = vset.pattern.permute.xlu0 1
        %345 = vperm.xlu0 %344, %v322
        %v346 = vpop.permute.xlu0 %345
        %v348 = vmul.f32 %v346, %v343
        %v349 = vadd.f32 %v335, %v348
        %350 = vrot.lane.b32.xlu0 %v320, 126
        %v351 = vpop.permute.xlu0 %350
        %352 = vrot.lane.b32.xlu0 %v321, 126
        %v353 = vpop.permute.xlu0 %352
        %vm354 = vcmp.lt.s32.totalorder %v341, 126
        %v355 = vsel %vm354, %v351, %v353
        %356 = vset.pattern.permute.xlu0 2
        %357 = vperm.xlu0 %356, %v322
        %v358 = vpop.permute.xlu0 %357
        %v360 = vmul.f32 %v358, %v355
        %v361 = vadd.f32 %v349, %v360
        %v362 = vmul.f32 %v361, 0.01
        %v363 = vmax.f32 %v361, %v362
        %v364 = vld [vmem:[%s4] sm:$0xff]
        %v365 = vld [vmem:[%s5] sm:$0xff]
        %367 = vset.pattern.permute.xlu0 0
        %368 = vperm.xlu0 %367, %v365
        %v369 = vpop.permute.xlu0 %368
        %vm371 = vcmask 31744
        %v373 = vsel %vm371, %v364, 0
        %vm375 = vcmask 1043456
        %v377 = vsel %vm375, %v363, 0
        %379 = vmatprep.subr.mxu0 0.0
        %380 = vmatpush1.msra.mxu0 0.0
        %381 = vmatprep.subr.mxu0 0.0
        %382 = vmatpush1.msra.mxu0 0.0
        %383 = vmatprep.subr.mxu0 0.0
        %384 = vmatpush1.msra.mxu0 0.0
        %385 = vmatprep.subr.mxu0 0.0
        %386 = vmatpush1.msra.mxu0 0.0
        %387 = vmatprep.subr.mxu0 0.0
        %388 = vmatpush1.msra.mxu0 0.0
        %389 = vmatprep.subr.mxu0 0.0
        %390 = vmatpush1.msra.mxu0 0.0
        %391 = vmatprep.subr.mxu0 0.0
        %392 = vmatpush1.msra.mxu0 0.0
        %393 = vmatprep.subr.mxu0 0.0
        %394 = vmatpush1.msra.mxu0 0.0
        %395 = vmatprep.subr.mxu0 0.0
        %396 = vmatpush1.msra.mxu0 0.0
        %397 = vmatprep.subr.mxu0 0.0
        %398 = vmatpush1.msra.mxu0 0.0
        %399 = vmatprep.subr.mxu0 0.0
        %400 = vmatpush1.msra.mxu0 0.0
        %401 = vmatprep.subr.mxu0 0.0
        %402 = vmatpush1.msra.mxu0 0.0
        %403 = vmatprep.subr.mxu0 0.0
        %404 = vmatpush1.msra.mxu0 0.0
        %405 = vmatprep.subr.mxu0 0.0
        %406 = vmatpush1.msra.mxu0 0.0
        %407 = vmatprep.subr.mxu0 0.0
        %408 = vmatpush1.msra.mxu0 0.0
        %409 = vmatprep.subr.mxu0 0.0
        %410 = vmatpush1.msra.mxu0 %v377
        %411 = vmatprep.subr.mxu0 0.0
        %412 = vmatpush2.msra.mxu0 0.0
        %413 = vmatprep.subr.mxu0 0.0
        %414 = vmatpush2.msra.mxu0 0.0
        %415 = vmatprep.subr.mxu0 0.0
        %416 = vmatpush2.msra.mxu0 0.0
        %417 = vmatprep.subr.mxu0 0.0
        %418 = vmatpush2.msra.mxu0 0.0
        %419 = vmatprep.subr.mxu0 0.0
        %420 = vmatpush2.msra.mxu0 0.0
        %421 = vmatprep.subr.mxu0 0.0
        %422 = vmatpush2.msra.mxu0 0.0
        %423 = vmatprep.subr.mxu0 0.0
        %424 = vmatpush2.msra.mxu0 0.0
        %425 = vmatprep.subr.mxu0 0.0
        %426 = vmatpush2.msra.mxu0 0.0
        %427 = vmatprep.subr.mxu0 0.0
        %428 = vmatpush2.msra.mxu0 0.0
        %429 = vmatprep.subr.mxu0 0.0
        %430 = vmatpush2.msra.mxu0 0.0
        %431 = vmatprep.subr.mxu0 0.0
        %432 = vmatpush2.msra.mxu0 0.0
        %433 = vmatprep.subr.mxu0 0.0
        %434 = vmatpush2.msra.mxu0 0.0
        %435 = vmatprep.subr.mxu0 0.0
        %436 = vmatpush2.msra.mxu0 0.0
        %437 = vmatprep.subr.mxu0 0.0
        %438 = vmatpush2.msra.mxu0 0.0
        %439 = vmatprep.subr.mxu0 0.0
        %440 = vmatpush2.msra.mxu0 0.0
        %441 = vmatprep.subr.mxu0 0.0
        %442 = vmatpush2.msra.mxu0 0.0
        %443 = vmatprep.mubr.f32.mxu0 0.0
        %444 = vmatmul.mubr.f32.gmra.mxu0 %v373
        %v445 = vpop.f32.mrf.mxu0
        %v446 = vadd.f32 %v369, %v445
        %v447 = vpop.f32.mrf.mxu0
        %448 = vdwg.mxu0
        %v449 = vmul.f32 %v446, 0.01
        %v450 = vmax.f32 %v446, %v449
        %451 = vst [vmem:[%s310] sm:$0xff] %v450
        %s452 = sand.u32 %s187, 1
        %s453 = scalar_lea.sflag [#allocation4], %s452
        %s454 = sand.u32 %s187, 1
        %s455 = smul.addr %s454, 8
        %s456 = scalar_lea.vmem [#allocation5], %s455
        // Predicated region
        $region49: #{tpu_custom_call.1} parent=43 // pred_check
          %p457 = pneg %p197
        $region50: #{tpu_custom_call.1} parent=43 // pred_check_branch
          %459 = sbr.rel (%p457) target = $region52
        $region51: #{tpu_custom_call.1} parent=43 // pred_region
          %s461 = ssub.s32 128, 128
          %462 = vsyncadd %s453, %s461
          %s463 = sadd.s32 %s28, %s27
          %s464 = smul.addr %s463, 128
          %s465 = scalar_lea.hbm %s6, %s464
          %s467 = sshll.u32 %s456, 4
          %s468 = int_to_ptr.vmem [resolvable:$true] %s467
          %470 = dma.vmem_to_hbm [thread:$0]  %s468, 128, %s465, %s453
        $region52: #{tpu_custom_call.1} parent=43 // pred_fallthru
          _
      $region44: #{tpu_custom_call.1} parent=5 // pred_fallthru
        _
      %p471 = scmp.le.s32.totalorder 2, %s18
      // Predicated region
      $region53: #{tpu_custom_call.1} parent=5 // pred_check
        %p472 = pneg %p471
      $region54: #{tpu_custom_call.1} parent=5 // pred_check_branch
        %474 = sbr.rel (%p472) target = $region56
      $region55: #{tpu_custom_call.1} parent=5 // pred_region
        %s475 = ssub.s32 %s18, 2
        // Predicated region
        $region57: #{tpu_custom_call.1} parent=55 // pred_check
          %p476 = pneg %p203
        $region58: #{tpu_custom_call.1} parent=55 // pred_check_branch
          %478 = sbr.rel (%p476) target = $region60
        $region59: #{tpu_custom_call.1} parent=55 // pred_region
          %s479 = sand.u32 %s188, 1
          %s480 = scalar_lea.sflag [#allocation4], %s479
          %s481 = sand.u32 %s188, 1
          %s482 = smul.addr %s481, 8
          %s483 = scalar_lea.vmem [#allocation5], %s482
          %484 = dma.done %s480, 128
        $region60: #{tpu_custom_call.1} parent=55 // pred_fallthru
          _
      $region56: #{tpu_custom_call.1} parent=5 // pred_fallthru
        _
    $region6: #{tpu_custom_call.1} parent=1 // loop_footer
      %s22 = sadd.s32 1, %s18
    $region7: #{tpu_custom_call.1} parent=1 // loop_footer_branch
      %17 = sbr.rel target = $region3
    $region8: #{tpu_custom_call.1} parent=1 // loop_exit
      _
    %485 = vsyncpa [#allocation3], 1
    %s486 = scalar_lea.sflag [#allocation3], 1
    %487 = vsyncpa %s486, 1
    %488 = vsyncpa [#allocation4], 1
    %s489 = scalar_lea.sflag [#allocation4], 1
    %490 = vsyncpa %s489, 1

</llo_original>
